<compile_context>
chip_gen: v7x
topology: tpu7x:2x2x1
jax: 0.10.0
libtpu: 0.0.40
codegen_flags: <defaults>
</compile_context>

<pallas_src>
import functools

import jax
import jax.numpy as jnp
from jax.experimental import pallas as pl
from jax.experimental.pallas import tpu as pltpu


def mlp_kernel(x_ref, w1_ref, b1_ref, w2_ref, b2_ref, w3_ref, b3_ref, o_ref):
    """Fused MLP forward for one batch tile.

    x_ref  : (TB, Dp)   bf16
    w1_ref : (Dp, 256)  bf16     b1_ref : (1, 256) f32
    w2_ref : (256, 128) bf16     b2_ref : (1, 128) f32   (BN folded in)
    w3_ref : (1, 128)   f32      b3_ref : (1, 1)   f32   (SMEM scalar)
    o_ref  : (TB, 1)    f32
    """
    x = x_ref[...]                                                   # (TB, Dp) bf16

    # Linear(input_size, 256) + ReLU   (MXU bf16, f32 accumulation)
    h1 = jnp.dot(x, w1_ref[...], preferred_element_type=jnp.float32)
    h1 = jnp.maximum(h1 + b1_ref[...], 0.0)                          # (TB, 256) f32

    # BatchNorm1d(256) eval-mode folded into w2/b2; Dropout eval == identity.
    # Linear(256, 128) + ReLU
    h2 = jnp.dot(h1.astype(jnp.bfloat16), w2_ref[...],
                 preferred_element_type=jnp.float32)
    h2 = jnp.maximum(h2 + b2_ref[...], 0.0)                          # (TB, 128) f32

    # Linear(128, 1): VPU multiply + XLU cross-lane reduce (MXU stays free).
    h3 = jnp.sum(h2 * w3_ref[...], axis=-1, keepdims=True) + b3_ref[0, 0]   # (TB, 1)

    # Sigmoid (EUP), f32.
    o_ref[...] = jax.nn.sigmoid(h3)


def _round_up(n, m):
    return ((n + m - 1) // m) * m


def _fold_bn_into_linear2(params):
    """Fold eval-mode BatchNorm1d(256) into the second Linear layer."""
    scale = params["gamma"] / jnp.sqrt(params["running_var"] + params["bn_eps"])  # (1,256)
    shift = params["beta"] - params["running_mean"] * scale                       # (1,256)
    w2_folded = scale.reshape(-1, 1) * params["w2"]            # (256, 128)
    b2_folded = params["b2"] + shift @ params["w2"]            # (1, 128)
    return w2_folded, b2_folded


@functools.partial(jax.jit, static_argnames=("block_b",))
def neural_network_forward(x, params, *, block_b=512):
    """x: (B, input_size) float32 -> (B, 1) float32 probabilities (eval mode)."""
    w1, b1, w3, b3 = params["w1"], params["b1"], params["w3"], params["b3"]
    w2_f, b2_f = _fold_bn_into_linear2(params)

    B, D = x.shape
    H1, H2 = w1.shape[1], w2_f.shape[1]

    # Pad feature dim to a lane-dense multiple of 128 (zeros in x and w1 -> same result).
    Dp = _round_up(D, 128)
    if Dp != D:
        x = jnp.pad(x, ((0, 0), (0, Dp - D)))
        w1 = jnp.pad(w1, ((0, Dp - D), (0, 0)))

    # Batch tile: multiple of 16 (bf16 sublane packing), capped at block_b.
    TB = min(block_b, _round_up(B, 16))
    B_pad = _round_up(B, TB)
    if B_pad != B:
        x = jnp.pad(x, ((0, B_pad - B), (0, 0)))

    # bf16 MXU operands; biases / w3 / epilogue stay f32.
    x_bf = x.astype(jnp.bfloat16)
    w1_bf = w1.astype(jnp.bfloat16)
    w2_bf = w2_f.astype(jnp.bfloat16)
    w3_row = w3.reshape(1, H2)                     # (1, 128) f32, lane row
    b3_sc = b3.reshape(1, 1)                       # (1, 1)   f32, SMEM scalar

    grid = (B_pad // TB,)

    cost = pl.CostEstimate(
        flops=2 * B_pad * (Dp * H1 + H1 * H2 + H2),
        transcendentals=B_pad,
        bytes_accessed=(B_pad * Dp * 2 + Dp * H1 * 2 + H1 * H2 * 2
                        + (H1 + H2 + H2 + 1) * 4 + B_pad * 4),
    )

    out = pl.pallas_call(
        mlp_kernel,
        out_shape=jax.ShapeDtypeStruct((B_pad, 1), jnp.float32),
        grid=grid,
        in_specs=[
            pl.BlockSpec((TB, Dp), lambda i: (i, 0)),          # x: tiled along batch
            pl.BlockSpec((Dp, H1), lambda i: (0, 0)),          # w1: resident
            pl.BlockSpec((1, H1), lambda i: (0, 0)),           # b1: resident
            pl.BlockSpec((H1, H2), lambda i: (0, 0)),          # w2 (BN folded): resident
            pl.BlockSpec((1, H2), lambda i: (0, 0)),           # b2 (BN folded): resident
            pl.BlockSpec((1, H2), lambda i: (0, 0)),           # w3 row: resident
            pl.BlockSpec((1, 1), lambda i: (0, 0),
                         memory_space=pltpu.MemorySpace.SMEM),  # b3 scalar in SMEM
        ],
        out_specs=pl.BlockSpec((TB, 1), lambda i: (i, 0)),
        compiler_params=pltpu.CompilerParams(
            dimension_semantics=("parallel",)),
        cost_estimate=cost,
    )(x_bf, w1_bf, b1, w2_bf, b2_f, w3_row, b3_sc)

    return out[:B]


def reference_forward(x, params):
    """Pure-JAX f32 mirror of the PyTorch module in eval() mode."""
    h = jnp.maximum(x @ params["w1"] + params["b1"], 0.0)
    scale = params["gamma"] / jnp.sqrt(params["running_var"] + params["bn_eps"])
    h = (h - params["running_mean"]) * scale + params["beta"]      # BatchNorm1d eval
    # Dropout(0.2) eval-mode == identity.
    h = jnp.maximum(h @ params["w2"] + params["b2"], 0.0)
    h = h @ params["w3"] + params["b3"]
    return jax.nn.sigmoid(h)


def init_params(key, input_size):
    """Deterministic synthetic parameters matching the PyTorch module shapes."""
    ks = jax.random.split(key, 8)
    h1, h2, h3 = 256, 128, 1

    def uniform(k, shape, fan_in):
        bound = 1.0 / jnp.sqrt(fan_in)
        return jax.random.uniform(k, shape, jnp.float32, -bound, bound)

    # Linear weights stored as (in, out) == PyTorch weight.T
    return {
        "w1": uniform(ks[0], (input_size, h1), input_size),
        "b1": uniform(ks[1], (1, h1), input_size),
        "w2": uniform(ks[2], (h1, h2), h1),
        "b2": uniform(ks[3], (1, h2), h1),
        "w3": uniform(ks[4], (h2, h3), h2),
        "b3": uniform(ks[5], (1, h3), h2),
        "gamma": 1.0 + 0.1 * jax.random.normal(ks[6], (1, h1), jnp.float32),
        "beta": 0.1 * jax.random.normal(ks[7], (1, h1), jnp.float32),
        "running_mean": jnp.zeros((1, h1), jnp.float32),
        "running_var": jnp.ones((1, h1), jnp.float32),
        "bn_eps": jnp.float32(1e-5),
    }


if __name__ == "__main__":
    key = jax.random.PRNGKey(0)
    k_x, k_p = jax.random.split(key)

    batch, input_size = 8, 32
    x = jax.random.normal(k_x, (batch, input_size), jnp.float32)
    params = init_params(k_p, input_size)

    out = neural_network_forward(x, params)
    out = jax.block_until_ready(out)

    ref = reference_forward(x, params)

    assert out.shape == (batch, 1)
    assert bool(jnp.all((out >= 0.0) & (out <= 1.0)))
    assert bool(jnp.allclose(out, ref, atol=2e-2, rtol=2e-2)), (
        f"max abs diff {float(jnp.max(jnp.abs(out - ref)))}")
    print("KERNEL_OK")
</pallas_src>

<mosaic_0001>
module attributes {stable_mosaic.version = 11 : i64} {
  func.func @mlp_kernel(%arg0: i32, %arg1: memref<16x128xbf16, #tpu.memory_space<vmem>>, %arg2: memref<128x256xbf16, #tpu.memory_space<vmem>>, %arg3: memref<1x256xf32, #tpu.memory_space<vmem>>, %arg4: memref<256x128xbf16, #tpu.memory_space<vmem>>, %arg5: memref<1x128xf32, #tpu.memory_space<vmem>>, %arg6: memref<1x128xf32, #tpu.memory_space<vmem>>, %arg7: memref<1x1xf32, #tpu.memory_space<smem>>, %arg8: memref<16x1xf32, #tpu.memory_space<vmem>>) attributes {dimension_semantics = [#tpu.dimension_semantics<parallel>], iteration_bounds = array<i64: 1>, scalar_prefetch = 0 : i64, scratch_operands = 0 : i64, tpu.core_type = #tpu.core_type<tc>, window_params = [{transform_indices = @transform_0, window_bounds = array<i64: 16, 128>}, {pipeline_mode = #tpu.pipeline_mode<synchronous>, transform_indices = @transform_1, window_bounds = array<i64: 128, 256>}, {pipeline_mode = #tpu.pipeline_mode<synchronous>, transform_indices = @transform_2, window_bounds = array<i64: 1, 256>}, {pipeline_mode = #tpu.pipeline_mode<synchronous>, transform_indices = @transform_3, window_bounds = array<i64: 256, 128>}, {pipeline_mode = #tpu.pipeline_mode<synchronous>, transform_indices = @transform_4, window_bounds = array<i64: 1, 128>}, {pipeline_mode = #tpu.pipeline_mode<synchronous>, transform_indices = @transform_5, window_bounds = array<i64: 1, 128>}, {transform_indices = @transform_6, window_bounds = array<i64: 1, 1>}, {transform_indices = @transform_7, window_bounds = array<i64: 16, 1>}]} {
    %c0 = arith.constant 0 : index
    %c0_0 = arith.constant 0 : index
    %0 = vector.load %arg1[%c0, %c0_0] : memref<16x128xbf16, #tpu.memory_space<vmem>>, vector<16x128xbf16>
    %c0_1 = arith.constant 0 : index
    %c0_2 = arith.constant 0 : index
    %1 = vector.load %arg2[%c0_1, %c0_2] : memref<128x256xbf16, #tpu.memory_space<vmem>>, vector<128x256xbf16>
    %cst = arith.constant dense<0.000000e+00> : vector<16x256xf32>
    %2 = tpu.matmul %0, %1, %cst {dimension_numbers = #tpu.dot_dimension_numbers<[1], [0], [0], [1], [0, 0, 1, 1], [], []>} : vector<16x128xbf16>, vector<128x256xbf16>, vector<16x256xf32> -> vector<16x256xf32>
    %c0_3 = arith.constant 0 : index
    %c0_4 = arith.constant 0 : index
    %3 = vector.load %arg3[%c0_3, %c0_4] : memref<1x256xf32, #tpu.memory_space<vmem>>, vector<1x256xf32>
    %4 = vector.broadcast %3 : vector<1x256xf32> to vector<16x256xf32>
    %5 = arith.addf %2, %4 : vector<16x256xf32>
    %cst_5 = arith.constant 0.000000e+00 : f32
    %6 = vector.broadcast %cst_5 : f32 to vector<16x256xf32>
    %7 = arith.maximumf %5, %6 : vector<16x256xf32>
    %8 = arith.truncf %7 : vector<16x256xf32> to vector<16x256xbf16>
    %c0_6 = arith.constant 0 : index
    %c0_7 = arith.constant 0 : index
    %9 = vector.load %arg4[%c0_6, %c0_7] : memref<256x128xbf16, #tpu.memory_space<vmem>>, vector<256x128xbf16>
    %cst_8 = arith.constant dense<0.000000e+00> : vector<16x128xf32>
    %10 = tpu.matmul %8, %9, %cst_8 {dimension_numbers = #tpu.dot_dimension_numbers<[1], [0], [0], [1], [0, 0, 1, 1], [], []>} : vector<16x256xbf16>, vector<256x128xbf16>, vector<16x128xf32> -> vector<16x128xf32>
    %c0_9 = arith.constant 0 : index
    %c0_10 = arith.constant 0 : index
    %11 = vector.load %arg5[%c0_9, %c0_10] : memref<1x128xf32, #tpu.memory_space<vmem>>, vector<1x128xf32>
    %12 = vector.broadcast %11 : vector<1x128xf32> to vector<16x128xf32>
    %13 = arith.addf %10, %12 : vector<16x128xf32>
    %cst_11 = arith.constant 0.000000e+00 : f32
    %14 = vector.broadcast %cst_11 : f32 to vector<16x128xf32>
    %15 = arith.maximumf %13, %14 : vector<16x128xf32>
    %c0_12 = arith.constant 0 : index
    %c0_13 = arith.constant 0 : index
    %16 = vector.load %arg6[%c0_12, %c0_13] : memref<1x128xf32, #tpu.memory_space<vmem>>, vector<1x128xf32>
    %17 = vector.broadcast %16 : vector<1x128xf32> to vector<16x128xf32>
    %18 = arith.mulf %15, %17 : vector<16x128xf32>
    %cst_14 = arith.constant dense<0.000000e+00> : vector<16xf32>
    %19 = vector.multi_reduction <add>, %18, %cst_14 [1] : vector<16x128xf32> to vector<16xf32>
    %20 = vector.shape_cast %19 : vector<16xf32> to vector<16x1xf32>
    %c0_15 = arith.constant 0 : index
    %c0_16 = arith.constant 0 : index
    %21 = memref.load %arg7[%c0_15, %c0_16] : memref<1x1xf32, #tpu.memory_space<smem>>
    %22 = vector.broadcast %21 : f32 to vector<16x1xf32>
    %23 = arith.addf %20, %22 : vector<16x1xf32>
    %24 = arith.negf %23 : vector<16x1xf32>
    %25 = math.exp %24 : vector<16x1xf32>
    %cst_17 = arith.constant 1.000000e+00 : f32
    %26 = vector.broadcast %cst_17 : f32 to vector<16x1xf32>
    %27 = arith.addf %26, %25 : vector<16x1xf32>
    %28 = arith.divf %26, %27 : vector<16x1xf32>
    %c0_18 = arith.constant 0 : index
    %c0_19 = arith.constant 0 : index
    %29 = vector.load %arg8[%c0_18, %c0_19] : memref<16x1xf32, #tpu.memory_space<vmem>>, vector<16x1xf32>
    tpu.vector_store %arg8[%c0_18, %c0_19], %28 {strides = array<i32>} : memref<16x1xf32, #tpu.memory_space<vmem>>, vector<16x1xf32>,
    return
  }
  func.func @transform_0(%arg0: i32) -> (i32, i32) {
    %c0_i32 = arith.constant 0 : i32
    %c0_i32_0 = arith.constant 0 : i32
    return %arg0, %c0_i32 : i32, i32
  }
  func.func @transform_1(%arg0: i32) -> (i32, i32) {
    %c0_i32 = arith.constant 0 : i32
    %c0_i32_0 = arith.constant 0 : i32
    %c0_i32_1 = arith.constant 0 : i32
    return %c0_i32, %c0_i32_0 : i32, i32
  }
  func.func @transform_2(%arg0: i32) -> (i32, i32) {
    %c0_i32 = arith.constant 0 : i32
    %c0_i32_0 = arith.constant 0 : i32
    %c0_i32_1 = arith.constant 0 : i32
    return %c0_i32, %c0_i32_0 : i32, i32
  }
  func.func @transform_3(%arg0: i32) -> (i32, i32) {
    %c0_i32 = arith.constant 0 : i32
    %c0_i32_0 = arith.constant 0 : i32
    %c0_i32_1 = arith.constant 0 : i32
    return %c0_i32, %c0_i32_0 : i32, i32
  }
  func.func @transform_4(%arg0: i32) -> (i32, i32) {
    %c0_i32 = arith.constant 0 : i32
    %c0_i32_0 = arith.constant 0 : i32
    %c0_i32_1 = arith.constant 0 : i32
    return %c0_i32, %c0_i32_0 : i32, i32
  }
  func.func @transform_5(%arg0: i32) -> (i32, i32) {
    %c0_i32 = arith.constant 0 : i32
    %c0_i32_0 = arith.constant 0 : i32
    %c0_i32_1 = arith.constant 0 : i32
    return %c0_i32, %c0_i32_0 : i32, i32
  }
  func.func @transform_6(%arg0: i32) -> (i32, i32) {
    %c0_i32 = arith.constant 0 : i32
    %c0_i32_0 = arith.constant 0 : i32
    %c0_i32_1 = arith.constant 0 : i32
    return %c0_i32, %c0_i32_0 : i32, i32
  }
  func.func @transform_7(%arg0: i32) -> (i32, i32) {
    %c0_i32 = arith.constant 0 : i32
    %c0_i32_0 = arith.constant 0 : i32
    return %arg0, %c0_i32 : i32, i32
  }
}

</mosaic_0001>

<llo_original>
// kernel: neural_network_forward.1
$region0: #{neural_network_forward.1}
  #allocation0 [shape = 'u32[]', space=smem, size = 0x4, offset = 0x4, fixed_abs, tag = 'smem constant byte address 0x4 - core index']
  #allocation1 [shape = 'u32[144,128]{1,0:T(1,128)}', space=vmem, size = 0x12000, scoped, tag = 'internal scratch']
  #allocation2 [shape = 'f32[1,1]{1,0:T(1,128)S(6)}', space=smem, size = 0x200, scoped, tag = 'scoped memory for neural_network_forward.1']
  %s0 = inlined_call_operand.vmem [shape: bf16[16,128], index: 0, kind: input, shape index: {}]
  %s1 = inlined_call_operand.vmem [shape: bf16[128,256], index: 1, kind: input, shape index: {}]
  %s2 = inlined_call_operand.vmem [shape: f32[1,256], index: 2, kind: input, shape index: {}]
  %s3 = inlined_call_operand.vmem [shape: bf16[256,128], index: 3, kind: input, shape index: {}]
  %s4 = inlined_call_operand.vmem [shape: f32[1,128], index: 4, kind: input, shape index: {}]
  %s5 = inlined_call_operand.vmem [shape: f32[1,128], index: 5, kind: input, shape index: {}]
  %s6 = inlined_call_operand.<no memory space> [shape: f32[1,1], index: 6, kind: input, shape index: {}]
  %s7 = inlined_call_operand.vmem [shape: f32[16,1], index: 7, kind: output, shape index: {}]
  %s8 = sld [smem:[#allocation0]]
  $region38: #{neural_network_forward.1} parent=0
    _
  %s10 = ssub.s32 1, %s8
  %s11 = scalar_select 0, %s10, %s8
  %12 = sst [smem:[#allocation2]] %s6
  // Predicated region
  $region2: #{neural_network_forward.1} parent=0 // pred_check
    _
  $region3: #{neural_network_forward.1} parent=0 // pred_check_branch
    %14 = sbr.rel (0) target = $region5
  $region4: #{neural_network_forward.1} parent=0 // pred_region
    _
  $region5: #{neural_network_forward.1} parent=0 // pred_fallthru
    _
  // Predicated region
  $region6: #{neural_network_forward.1} parent=0 // pred_check
    _
  $region7: #{neural_network_forward.1} parent=0 // pred_check_branch
    %16 = sbr.rel (0) target = $region9
  $region8: #{neural_network_forward.1} parent=0 // pred_region
    _
  $region9: #{neural_network_forward.1} parent=0 // pred_fallthru
    _
  // Predicated region
  $region10: #{neural_network_forward.1} parent=0 // pred_check
    _
  $region11: #{neural_network_forward.1} parent=0 // pred_check_branch
    %18 = sbr.rel (0) target = $region13
  $region12: #{neural_network_forward.1} parent=0 // pred_region
    _
  $region13: #{neural_network_forward.1} parent=0 // pred_fallthru
    _
  // Predicated region
  $region14: #{neural_network_forward.1} parent=0 // pred_check
    _
  $region15: #{neural_network_forward.1} parent=0 // pred_check_branch
    %20 = sbr.rel (0) target = $region17
  $region16: #{neural_network_forward.1} parent=0 // pred_region
    _
  $region17: #{neural_network_forward.1} parent=0 // pred_fallthru
    _
  // Predicated region
  $region18: #{neural_network_forward.1} parent=0 // pred_check
    _
  $region19: #{neural_network_forward.1} parent=0 // pred_check_branch
    %22 = sbr.rel (0) target = $region21
  $region20: #{neural_network_forward.1} parent=0 // pred_region
    _
  $region21: #{neural_network_forward.1} parent=0 // pred_fallthru
    _
  // Predicated region
  $region22: #{neural_network_forward.1} parent=0 // pred_check
    _
  $region23: #{neural_network_forward.1} parent=0 // pred_check_branch
    %24 = sbr.rel (0) target = $region25
  $region24: #{neural_network_forward.1} parent=0 // pred_region
    _
  $region25: #{neural_network_forward.1} parent=0 // pred_fallthru
    _
  // Predicated region
  $region26: #{neural_network_forward.1} parent=0 // pred_check
    _
  $region27: #{neural_network_forward.1} parent=0 // pred_check_branch
    %26 = sbr.rel (0) target = $region29
  $region28: #{neural_network_forward.1} parent=0 // pred_region
    _
  $region29: #{neural_network_forward.1} parent=0 // pred_fallthru
    _
  %v28 = vld [vmem:[%s0] sm:$0xf]
  %v29 = vld [vmem:[%s0 + $0x4] sm:$0xf]
  %v30 = vld [vmem:[%s1] sm:$0xff]
  %v31 = vld [vmem:[%s1 + $0x8] sm:$0xff]
  %v32 = vld [vmem:[%s1 + $0x10] sm:$0xff]
  %v33 = vld [vmem:[%s1 + $0x18] sm:$0xff]
  %v34 = vld [vmem:[%s1 + $0x20] sm:$0xff]
  %v35 = vld [vmem:[%s1 + $0x28] sm:$0xff]
  %v36 = vld [vmem:[%s1 + $0x30] sm:$0xff]
  %v37 = vld [vmem:[%s1 + $0x38] sm:$0xff]
  %v38 = vld [vmem:[%s1 + $0x40] sm:$0xff]
  %v39 = vld [vmem:[%s1 + $0x48] sm:$0xff]
  %v40 = vld [vmem:[%s1 + $0x50] sm:$0xff]
  %v41 = vld [vmem:[%s1 + $0x58] sm:$0xff]
  %v42 = vld [vmem:[%s1 + $0x60] sm:$0xff]
  %v43 = vld [vmem:[%s1 + $0x68] sm:$0xff]
  %v44 = vld [vmem:[%s1 + $0x70] sm:$0xff]
  %v45 = vld [vmem:[%s1 + $0x78] sm:$0xff]
  %v46 = vld [vmem:[%s2] sm:$0x3]
  %v48 = vlaneseq
  %v49 = vshrl.u32 %v48, 7
  %v50 = vsub.s32 0, %v49
  %v51 = vrot.slane %v46, %v50
  %v52 = vlaneseq
  %v53 = vshrl.u32 %v52, 7
  %v54 = vsub.s32 1, %v53
  %v55 = vrot.slane %v46, %v54
  %v60 = vunpack.c.l.b16 %v28
  %v61 = vunpack.c.l.b16 %v29
  %v62 = vpack.c.b16 %v61, %v60
  %v80 = vunpack.c.l.b16 %v30
  %v81 = vunpack.c.h.b16 %v30
  %v82 = vunpack.c.l.b16 %v31
  %v83 = vunpack.c.h.b16 %v31
  %v84 = vunpack.c.l.b16 %v32
  %v85 = vunpack.c.h.b16 %v32
  %v86 = vunpack.c.l.b16 %v33
  %v87 = vunpack.c.h.b16 %v33
  %v88 = vunpack.c.l.b16 %v34
  %v89 = vunpack.c.h.b16 %v34
  %v90 = vunpack.c.l.b16 %v35
  %v91 = vunpack.c.h.b16 %v35
  %v92 = vunpack.c.l.b16 %v36
  %v93 = vunpack.c.h.b16 %v36
  %v94 = vunpack.c.l.b16 %v37
  %v95 = vunpack.c.h.b16 %v37
  %v96 = vunpack.c.l.b16 %v38
  %v97 = vunpack.c.h.b16 %v38
  %v98 = vunpack.c.l.b16 %v39
  %v99 = vunpack.c.h.b16 %v39
  %v100 = vunpack.c.l.b16 %v40
  %v101 = vunpack.c.h.b16 %v40
  %v102 = vunpack.c.l.b16 %v41
  %v103 = vunpack.c.h.b16 %v41
  %v104 = vunpack.c.l.b16 %v42
  %v105 = vunpack.c.h.b16 %v42
  %v106 = vunpack.c.l.b16 %v43
  %v107 = vunpack.c.h.b16 %v43
  %v108 = vunpack.c.l.b16 %v44
  %v109 = vunpack.c.h.b16 %v44
  %v110 = vunpack.c.l.b16 %v45
  %v111 = vunpack.c.h.b16 %v45
  %v112 = vpack.c.b16 %v82, %v80
  %v113 = vpack.c.b16 %v83, %v81
  %v114 = vpack.c.b16 %v86, %v84
  %v115 = vpack.c.b16 %v87, %v85
  %v116 = vpack.c.b16 %v90, %v88
  %v117 = vpack.c.b16 %v91, %v89
  %v118 = vpack.c.b16 %v94, %v92
  %v119 = vpack.c.b16 %v95, %v93
  %v120 = vpack.c.b16 %v98, %v96
  %v121 = vpack.c.b16 %v99, %v97
  %v122 = vpack.c.b16 %v102, %v100
  %v123 = vpack.c.b16 %v103, %v101
  %v124 = vpack.c.b16 %v106, %v104
  %v125 = vpack.c.b16 %v107, %v105
  %v126 = vpack.c.b16 %v110, %v108
  %v127 = vpack.c.b16 %v111, %v109
  %144 = vmatprep.subr.bf16.mxu0 %v113
  %145 = vmatpush1.bf16.msra.mxu0 %v112
  %146 = vmatprep.subr.bf16.mxu0 %v115
  %147 = vmatpush1.bf16.msra.mxu0 %v114
  %148 = vmatprep.subr.bf16.mxu0 %v117
  %149 = vmatpush1.bf16.msra.mxu0 %v116
  %150 = vmatprep.subr.bf16.mxu0 %v119
  %151 = vmatpush1.bf16.msra.mxu0 %v118
  %152 = vmatprep.subr.bf16.mxu0 %v121
  %153 = vmatpush1.bf16.msra.mxu0 %v120
  %154 = vmatprep.subr.bf16.mxu0 %v123
  %155 = vmatpush1.bf16.msra.mxu0 %v122
  %156 = vmatprep.subr.bf16.mxu0 %v125
  %157 = vmatpush1.bf16.msra.mxu0 %v124
  %158 = vmatprep.subr.bf16.mxu0 %v127
  %159 = vmatpush1.bf16.msra.mxu0 %v126
  %160 = vmatprep.subr.bf16.mxu0 0
  %161 = vmatpush1.bf16.msra.mxu0 0
  %162 = vmatprep.subr.bf16.mxu0 0
  %163 = vmatpush1.bf16.msra.mxu0 0
  %164 = vmatprep.subr.bf16.mxu0 0
  %165 = vmatpush1.bf16.msra.mxu0 0
  %166 = vmatprep.subr.bf16.mxu0 0
  %167 = vmatpush1.bf16.msra.mxu0 0
  %168 = vmatprep.subr.bf16.mxu0 0
  %169 = vmatpush1.bf16.msra.mxu0 0
  %170 = vmatprep.subr.bf16.mxu0 0
  %171 = vmatpush1.bf16.msra.mxu0 0
  %172 = vmatprep.subr.bf16.mxu0 0
  %173 = vmatpush1.bf16.msra.mxu0 0
  %174 = vmatprep.subr.bf16.mxu0 0
  %175 = vmatpush1.bf16.msra.mxu0 0
  %176 = vmatprep.mubr.bf16.mxu0 0
  %177 = vmatmul.mubr.bf16.gmra.mrb[0].mxu0 %v62
  %v178 = vpop.f32.mrb[0].mxu0
  %v179 = vadd.f32 %v51, %v178
  %v180 = vpop.f32.mrb[0].mxu0
  %v181 = vadd.f32 %v55, %v180
  %v182 = vpop.f32.mrb[0].mxu0
  %v183 = vadd.f32 %v51, %v182
  %v184 = vpop.f32.mrb[0].mxu0
  %v185 = vadd.f32 %v55, %v184
  %186 = vdwg.mxu0
  %v187 = vmax.f32 %v179, 0.0
  %v188 = vmax.f32 %v181, 0.0
  %v189 = vmax.f32 %v183, 0.0
  %v190 = vmax.f32 %v185, 0.0
  %v191 = vpack.c.bf16 %v189, %v187
  %v192 = vpack.c.bf16 %v190, %v188
  %v193 = vld [vmem:[%s3] sm:$0xf]
  %v194 = vld [vmem:[%s3 + $0x4] sm:$0xf]
  %v195 = vld [vmem:[%s3 + $0x8] sm:$0xf]
  %v196 = vld [vmem:[%s3 + $0xc] sm:$0xf]
  %v197 = vld [vmem:[%s3 + $0x10] sm:$0xf]
  %v198 = vld [vmem:[%s3 + $0x14] sm:$0xf]
  %v199 = vld [vmem:[%s3 + $0x18] sm:$0xf]
  %v200 = vld [vmem:[%s3 + $0x1c] sm:$0xf]
  %v201 = vld [vmem:[%s3 + $0x20] sm:$0xf]
  %v202 = vld [vmem:[%s3 + $0x24] sm:$0xf]
  %v203 = vld [vmem:[%s3 + $0x28] sm:$0xf]
  %v204 = vld [vmem:[%s3 + $0x2c] sm:$0xf]
  %v205 = vld [vmem:[%s3 + $0x30] sm:$0xf]
  %v206 = vld [vmem:[%s3 + $0x34] sm:$0xf]
  %v207 = vld [vmem:[%s3 + $0x38] sm:$0xf]
  %v208 = vld [vmem:[%s3 + $0x3c] sm:$0xf]
  %v209 = vld [vmem:[%s3 + $0x40] sm:$0xf]
  %v210 = vld [vmem:[%s3 + $0x44] sm:$0xf]
  %v211 = vld [vmem:[%s3 + $0x48] sm:$0xf]
  %v212 = vld [vmem:[%s3 + $0x4c] sm:$0xf]
  %v213 = vld [vmem:[%s3 + $0x50] sm:$0xf]
  %v214 = vld [vmem:[%s3 + $0x54] sm:$0xf]
  %v215 = vld [vmem:[%s3 + $0x58] sm:$0xf]
  %v216 = vld [vmem:[%s3 + $0x5c] sm:$0xf]
  %v217 = vld [vmem:[%s3 + $0x60] sm:$0xf]
  %v218 = vld [vmem:[%s3 + $0x64] sm:$0xf]
  %v219 = vld [vmem:[%s3 + $0x68] sm:$0xf]
  %v220 = vld [vmem:[%s3 + $0x6c] sm:$0xf]
  %v221 = vld [vmem:[%s3 + $0x70] sm:$0xf]
  %v222 = vld [vmem:[%s3 + $0x74] sm:$0xf]
  %v223 = vld [vmem:[%s3 + $0x78] sm:$0xf]
  %v224 = vld [vmem:[%s3 + $0x7c] sm:$0xf]
  %v225 = vld [vmem:[%s4] sm:$0x1]
  %v227 = vlaneseq
  %v228 = vshrl.u32 %v227, 7
  %v229 = vsub.s32 0, %v228
  %v230 = vrot.slane %v225, %v229
  %v264 = vunpack.c.l.b16 %v193
  %v265 = vunpack.c.l.b16 %v194
  %v266 = vunpack.c.l.b16 %v195
  %v267 = vunpack.c.l.b16 %v196
  %v268 = vunpack.c.l.b16 %v197
  %v269 = vunpack.c.l.b16 %v198
  %v270 = vunpack.c.l.b16 %v199
  %v271 = vunpack.c.l.b16 %v200
  %v272 = vunpack.c.l.b16 %v201
  %v273 = vunpack.c.l.b16 %v202
  %v274 = vunpack.c.l.b16 %v203
  %v275 = vunpack.c.l.b16 %v204
  %v276 = vunpack.c.l.b16 %v205
  %v277 = vunpack.c.l.b16 %v206
  %v278 = vunpack.c.l.b16 %v207
  %v279 = vunpack.c.l.b16 %v208
  %v280 = vunpack.c.l.b16 %v209
  %v281 = vunpack.c.l.b16 %v210
  %v282 = vunpack.c.l.b16 %v211
  %v283 = vunpack.c.l.b16 %v212
  %v284 = vunpack.c.l.b16 %v213
  %v285 = vunpack.c.l.b16 %v214
  %v286 = vunpack.c.l.b16 %v215
  %v287 = vunpack.c.l.b16 %v216
  %v288 = vunpack.c.l.b16 %v217
  %v289 = vunpack.c.l.b16 %v218
  %v290 = vunpack.c.l.b16 %v219
  %v291 = vunpack.c.l.b16 %v220
  %v292 = vunpack.c.l.b16 %v221
  %v293 = vunpack.c.l.b16 %v222
  %v294 = vunpack.c.l.b16 %v223
  %v295 = vunpack.c.l.b16 %v224
  %v296 = vpack.c.b16 %v265, %v264
  %v297 = vpack.c.b16 %v267, %v266
  %v298 = vpack.c.b16 %v269, %v268
  %v299 = vpack.c.b16 %v271, %v270
  %v300 = vpack.c.b16 %v273, %v272
  %v301 = vpack.c.b16 %v275, %v274
  %v302 = vpack.c.b16 %v277, %v276
  %v303 = vpack.c.b16 %v279, %v278
  %v304 = vpack.c.b16 %v281, %v280
  %v305 = vpack.c.b16 %v283, %v282
  %v306 = vpack.c.b16 %v285, %v284
  %v307 = vpack.c.b16 %v287, %v286
  %v308 = vpack.c.b16 %v289, %v288
  %v309 = vpack.c.b16 %v291, %v290
  %v310 = vpack.c.b16 %v293, %v292
  %v311 = vpack.c.b16 %v295, %v294
  %328 = vmatprep.subr.bf16.mxu0 0
  %329 = vmatpush1.bf16.msra.mxu0 %v296
  %330 = vmatprep.subr.bf16.mxu0 0
  %331 = vmatpush1.bf16.msra.mxu0 %v297
  %332 = vmatprep.subr.bf16.mxu0 0
  %333 = vmatpush1.bf16.msra.mxu0 %v298
  %334 = vmatprep.subr.bf16.mxu0 0
  %335 = vmatpush1.bf16.msra.mxu0 %v299
  %336 = vmatprep.subr.bf16.mxu0 0
  %337 = vmatpush1.bf16.msra.mxu0 %v300
  %338 = vmatprep.subr.bf16.mxu0 0
  %339 = vmatpush1.bf16.msra.mxu0 %v301
  %340 = vmatprep.subr.bf16.mxu0 0
  %341 = vmatpush1.bf16.msra.mxu0 %v302
  %342 = vmatprep.subr.bf16.mxu0 0
  %343 = vmatpush1.bf16.msra.mxu0 %v303
  %344 = vmatprep.subr.bf16.mxu0 0
  %345 = vmatpush1.bf16.msra.mxu0 %v304
  %346 = vmatprep.subr.bf16.mxu0 0
  %347 = vmatpush1.bf16.msra.mxu0 %v305
  %348 = vmatprep.subr.bf16.mxu0 0
  %349 = vmatpush1.bf16.msra.mxu0 %v306
  %350 = vmatprep.subr.bf16.mxu0 0
  %351 = vmatpush1.bf16.msra.mxu0 %v307
  %352 = vmatprep.subr.bf16.mxu0 0
  %353 = vmatpush1.bf16.msra.mxu0 %v308
  %354 = vmatprep.subr.bf16.mxu0 0
  %355 = vmatpush1.bf16.msra.mxu0 %v309
  %356 = vmatprep.subr.bf16.mxu0 0
  %357 = vmatpush1.bf16.msra.mxu0 %v310
  %358 = vmatprep.subr.bf16.mxu0 0
  %359 = vmatpush1.bf16.msra.mxu0 %v311
  %360 = vmatprep.mubr.bf16.mxu0 %v192
  %361 = vmatmul.mubr.bf16.gmra.mrb[0].mxu0 %v191
  %v362 = vpop.f32.mrb[0].mxu0
  %v363 = vadd.f32 %v230, %v362
  %v364 = vpop.f32.mrb[0].mxu0
  %v365 = vpop.f32.mrb[0].mxu0
  %v366 = vadd.f32 %v230, %v365
  %v367 = vpop.f32.mrb[0].mxu0
  %368 = vdwg.mxu0
  %v369 = vmax.f32 %v363, 0.0
  %v370 = vmax.f32 %v366, 0.0
  %v371 = vld [vmem:[%s5] sm:$0x1]
  %v373 = vlaneseq
  %v374 = vshrl.u32 %v373, 7
  %v375 = vsub.s32 0, %v374
  %v376 = vrot.slane %v371, %v375
  %v378 = vmul.f32 %v369, %v376
  %v379 = vmul.f32 %v370, %v376
  %380 = vadd.xlane.f32.xlu0 %v378
  %v381 = vpop.xlane.xlu0 %380
  %382 = vadd.xlane.f32.xlu0 %v379
  %v383 = vpop.xlane.xlu0 %382
  %s384 = sld [smem:[#allocation2]]
  %v385 = vstv %s384
  %v386 = vadd.f32 %v381, %v385
  %v387 = vadd.f32 %v383, %v385
  %v388 = vxor.u32 %v386, 2147483648
  %v389 = vxor.u32 %v387, 2147483648
  %v390 = vmul.f32 %v388, 1.442695
  %v391 = vpow.pop %v390
  %v392 = vmul.f32 %v389, 1.442695
  %v393 = vpow.pop %v392
  %v394 = vadd.f32 %v391, 1.0
  %v395 = vadd.f32 %v393, 1.0
  %v396 = vrcp.pop %v394
  %v397 = vmul.f32 1.0, %v396
  %v398 = vrcp.pop %v395
  %v399 = vmul.f32 1.0, %v398
  %vm400 = vcmask 7168
  %401 = vst.msk [vmem:[%s7] sm:$0xff] %vm400, %v397
  %402 = vst.msk [vmem:[%s7 + $0x8] sm:$0xff] %vm400, %v399
  // Predicated region
  $region30: #{neural_network_forward.1} parent=0 // pred_check
    _
  $region31: #{neural_network_forward.1} parent=0 // pred_check_branch
    %404 = sbr.rel (0) target = $region33
  $region32: #{neural_network_forward.1} parent=0 // pred_region
    _
  $region33: #{neural_network_forward.1} parent=0 // pred_fallthru
    _
  // Predicated region
  $region34: #{neural_network_forward.1} parent=0 // pred_check
    _
  $region35: #{neural_network_forward.1} parent=0 // pred_check_branch
    %406 = sbr.rel (0) target = $region37
  $region36: #{neural_network_forward.1} parent=0 // pred_region
    _
  $region37: #{neural_network_forward.1} parent=0 // pred_fallthru
    _

</llo_original>
